<compile_context>
chip_gen: v5e
topology: v5e:2x2
jax: 0.10.0
libtpu: 0.0.40
codegen_flags: <defaults>
</compile_context>

<pallas_src>
import functools

import jax
import jax.numpy as jnp
from jax.experimental import pallas as pl
from jax.experimental.pallas import tpu as pltpu


# ----------------------------------------------------------------------------
# Pallas kernel: full sequential LSTM decoder rollout.
# ----------------------------------------------------------------------------
def _lstm_decoder_kernel(h0_ref, wih_ref, weff_ref, bias0_ref, biaseff_ref,
                         xhat_ref, hout_ref, cout_ref,
                         *, seq_len, predict_backward, unroll_threshold):
    # Ref shapes:
    #   h0_ref     : (B, I)     initial "input" h fed to the cell at t=0
    #   wih_ref    : (I, 4H)    input->hidden weights, gates i|f|g|o on lanes
    #   weff_ref   : (H, 4H)    fused recurrent weight (Linear folded in)
    #   bias0_ref  : (1, 4H)    b_ih + b_hh                 (used at t == 0)
    #   biaseff_ref: (1, 4H)    lin_b @ Wih + bias0         (used at t  > 0)
    #   xhat_ref   : (T, B, H)  decoder outputs
    #   hout_ref/cout_ref : (B, H) final LSTM state
    B, H = hout_ref.shape

    wih = wih_ref[...]                                     # (I, 4H)
    w_eff = weff_ref[...]                                  # (H, 4H)
    # Hoist bias broadcasts out of the time loop (JAX does not CSE them).
    bias0 = jnp.broadcast_to(bias0_ref[...], (B, 4 * H))
    bias_eff = jnp.broadcast_to(biaseff_ref[...], (B, 4 * H))

    def lstm_gates(gates, c_prev):
        # One sigmoid over the whole (B, 4H) slab; tanh only on the g lanes.
        sig = jax.nn.sigmoid(gates)
        i_g = sig[:, 0 * H:1 * H]
        f_g = sig[:, 1 * H:2 * H]
        g_g = jnp.tanh(gates[:, 2 * H:3 * H])
        o_g = sig[:, 3 * H:4 * H]
        c_new = f_g * c_prev + i_g * g_g
        h_new = o_g * jnp.tanh(c_new)
        return h_new, c_new

    # t == 0: state is zero, so gates = h0 @ Wih + (b_ih + b_hh).
    gates0 = jnp.dot(h0_ref[...], wih,
                     preferred_element_type=jnp.float32) + bias0
    h_prev, c_prev = lstm_gates(gates0, jnp.zeros((B, H), jnp.float32))
    xhat_ref[0] = h_prev                       # (-0) % T == 0 either direction

    def recur(h_p, c_p):
        # Single fused MXU push per timestep: (B, H) x (H, 4H).
        gates = jnp.dot(h_p, w_eff,
                        preferred_element_type=jnp.float32) + bias_eff
        return lstm_gates(gates, c_p)

    if seq_len <= unroll_threshold:
        # Static unroll: state stays in vregs, static store indices.
        for t in range(1, seq_len):
            h_prev, c_prev = recur(h_prev, c_prev)
            t_pred = (seq_len - t) if predict_backward else t
            xhat_ref[t_pred] = h_prev
        hout_ref[...] = h_prev
        cout_ref[...] = c_prev
    else:
        # Long rollout: avoid code-size / regalloc blowup; carry state through
        # the (already-allocated) output refs and store with a dynamic index.
        hout_ref[...] = h_prev
        cout_ref[...] = c_prev

        @pl.loop(1, seq_len)
        def _(t):
            h_n, c_n = recur(hout_ref[...], cout_ref[...])
            t_pred = (seq_len - t) if predict_backward else t
            xhat_ref[t_pred] = h_n
            hout_ref[...] = h_n
            cout_ref[...] = c_n


# ----------------------------------------------------------------------------
# Wrapper
# ----------------------------------------------------------------------------
def lstm_decoder_forward(h, params, sequence_length, predict_backward=True):
    B, I = h.shape
    H = params["w_hh"].shape[1]
    use_linear = (I != H)
    f32 = jnp.float32

    # Fused, lane-major weight layout: (·, 4H) with gate order i|f|g|o.
    wih = params["w_ih"].T.astype(f32)                        # (I, 4H)
    whh = params["w_hh"].T.astype(f32)                        # (H, 4H)
    bias0 = (params["b_ih"] + params["b_hh"]).reshape(1, 4 * H).astype(f32)

    if use_linear:
        # Fold Linear(hidden->input) into the recurrent weight (t > 0 path):
        #   gates = h @ (lin_w^T @ Wih + Whh) + (lin_b @ Wih + bias0)
        lin_w_t = params["lin_w"].T.astype(f32)               # (H, I)
        lin_b = params["lin_b"].reshape(1, I).astype(f32)     # (1, I)
        w_eff = lin_w_t @ wih + whh                           # (H, 4H)
        bias_eff = lin_b @ wih + bias0                        # (1, 4H)
    else:
        w_eff = wih + whh                                     # (H, 4H), I == H
        bias_eff = bias0

    # Pad batch to a multiple of 8 sublanes; padded rows are sliced off after.
    B_pad = ((B + 7) // 8) * 8
    h_pad = h.astype(f32)
    if B_pad != B:
        h_pad = jnp.zeros((B_pad, I), f32).at[:B].set(h_pad)

    kernel = functools.partial(_lstm_decoder_kernel,
                               seq_len=int(sequence_length),
                               predict_backward=bool(predict_backward),
                               unroll_threshold=16)

    vmem = pl.BlockSpec(memory_space=pltpu.MemorySpace.VMEM)
    out_shape = (jax.ShapeDtypeStruct((sequence_length, B_pad, H), f32),
                 jax.ShapeDtypeStruct((B_pad, H), f32),
                 jax.ShapeDtypeStruct((B_pad, H), f32))

    x_hat, h_out, c_out = pl.pallas_call(
        kernel,
        out_shape=out_shape,
        in_specs=[vmem] * 5,
        out_specs=(vmem, vmem, vmem),
    )(h_pad, wih, w_eff, bias0, bias_eff)

    return x_hat[:, :B], (h_out[:B], c_out[:B])


# ----------------------------------------------------------------------------
# Pure-JAX reference (mirrors the PyTorch forward exactly)
# ----------------------------------------------------------------------------
def lstm_decoder_ref(h, params, sequence_length, predict_backward=True):
    B, I = h.shape
    H = params["w_hh"].shape[1]
    use_linear = (I != H)
    w_ih, w_hh = params["w_ih"], params["w_hh"]
    b_ih, b_hh = params["b_ih"], params["b_hh"]

    h_prev = jnp.zeros((B, H), jnp.float32)
    c_prev = jnp.zeros((B, H), jnp.float32)
    slots = [None] * sequence_length
    for t in range(sequence_length):
        if t == 0:
            x_in = h
        elif use_linear:
            x_in = h_prev @ params["lin_w"].T + params["lin_b"]
        else:
            x_in = h_prev
        gates = x_in @ w_ih.T + b_ih + h_prev @ w_hh.T + b_hh
        i = jax.nn.sigmoid(gates[:, 0 * H:1 * H])
        f = jax.nn.sigmoid(gates[:, 1 * H:2 * H])
        g = jnp.tanh(gates[:, 2 * H:3 * H])
        o = jax.nn.sigmoid(gates[:, 3 * H:4 * H])
        c_prev = f * c_prev + i * g
        h_prev = o * jnp.tanh(c_prev)
        slots[(-t) % sequence_length if predict_backward else t] = h_prev
    return jnp.stack(slots, axis=0), (h_prev, c_prev)


# ----------------------------------------------------------------------------
# Deterministic parameter init (PyTorch-style uniform(-1/sqrt(H), 1/sqrt(H)))
# ----------------------------------------------------------------------------
def init_params(key, input_size, hidden_size):
    k = 1.0 / float(hidden_size) ** 0.5
    keys = jax.random.split(key, 6)
    p = {
        "w_ih": jax.random.uniform(keys[0], (4 * hidden_size, input_size),
                                   jnp.float32, -k, k),
        "w_hh": jax.random.uniform(keys[1], (4 * hidden_size, hidden_size),
                                   jnp.float32, -k, k),
        "b_ih": jax.random.uniform(keys[2], (4 * hidden_size,),
                                   jnp.float32, -k, k),
        "b_hh": jax.random.uniform(keys[3], (4 * hidden_size,),
                                   jnp.float32, -k, k),
    }
    if input_size != hidden_size:
        p["lin_w"] = jax.random.uniform(keys[4], (input_size, hidden_size),
                                        jnp.float32, -k, k)
        p["lin_b"] = jax.random.uniform(keys[5], (input_size,),
                                        jnp.float32, -k, k)
    return p


def _run_case(key, batch, input_size, hidden_size, seq_len, predict_backward):
    k_param, k_h = jax.random.split(key)
    params = init_params(k_param, input_size, hidden_size)
    h0 = jax.random.normal(k_h, (batch, input_size), jnp.float32)

    x_hat, (h_out, c_out) = lstm_decoder_forward(h0, params, seq_len,
                                                 predict_backward)
    jax.block_until_ready((x_hat, h_out, c_out))

    x_ref, (h_ref, c_ref) = lstm_decoder_ref(h0, params, seq_len,
                                             predict_backward)
    assert x_hat.shape == (seq_len, batch, hidden_size), x_hat.shape
    assert jnp.allclose(x_hat, x_ref, rtol=1e-4, atol=1e-4), \
        float(jnp.max(jnp.abs(x_hat - x_ref)))
    assert jnp.allclose(h_out, h_ref, rtol=1e-4, atol=1e-4)
    assert jnp.allclose(c_out, c_ref, rtol=1e-4, atol=1e-4)


if __name__ == "__main__":
    key = jax.random.PRNGKey(0)
    k1, k2, k3 = jax.random.split(key, 3)

    # 1) Linear path, backward prediction, static-unroll branch.
    _run_case(k1, batch=2, input_size=8, hidden_size=32, seq_len=8,
              predict_backward=True)
    # 2) Linear path, long rollout -> pl.loop branch with dynamic stores.
    _run_case(k2, batch=2, input_size=8, hidden_size=32, seq_len=24,
              predict_backward=True)
    # 3) input_size == hidden_size (no Linear), forward prediction order.
    _run_case(k3, batch=2, input_size=32, hidden_size=32, seq_len=8,
              predict_backward=False)

    print("KERNEL_OK")
</pallas_src>

<mosaic_0001>
module attributes {stable_mosaic.version = 11 : i64} {
  func.func @_lstm_decoder_kernel(%arg0: memref<8x8xf32, #tpu.memory_space<vmem>>, %arg1: memref<8x128xf32, #tpu.memory_space<vmem>>, %arg2: memref<32x128xf32, #tpu.memory_space<vmem>>, %arg3: memref<1x128xf32, #tpu.memory_space<vmem>>, %arg4: memref<1x128xf32, #tpu.memory_space<vmem>>, %arg5: memref<8x8x32xf32, #tpu.memory_space<vmem>>, %arg6: memref<8x32xf32, #tpu.memory_space<vmem>>, %arg7: memref<8x32xf32, #tpu.memory_space<vmem>>) attributes {dimension_semantics = [], scalar_prefetch = 0 : i64, scratch_operands = 0 : i64, tpu.core_type = #tpu.core_type<tc>} {
    %c0 = arith.constant 0 : index
    %c0_0 = arith.constant 0 : index
    %0 = vector.load %arg1[%c0, %c0_0] : memref<8x128xf32, #tpu.memory_space<vmem>>, vector<8x128xf32>
    %c0_1 = arith.constant 0 : index
    %c0_2 = arith.constant 0 : index
    %1 = vector.load %arg2[%c0_1, %c0_2] : memref<32x128xf32, #tpu.memory_space<vmem>>, vector<32x128xf32>
    %c0_3 = arith.constant 0 : index
    %c0_4 = arith.constant 0 : index
    %2 = vector.load %arg3[%c0_3, %c0_4] : memref<1x128xf32, #tpu.memory_space<vmem>>, vector<1x128xf32>
    %3 = vector.shape_cast %2 : vector<1x128xf32> to vector<1x128xf32>
    %4 = vector.broadcast %3 : vector<1x128xf32> to vector<8x128xf32>
    %c0_5 = arith.constant 0 : index
    %c0_6 = arith.constant 0 : index
    %5 = vector.load %arg4[%c0_5, %c0_6] : memref<1x128xf32, #tpu.memory_space<vmem>>, vector<1x128xf32>
    %6 = vector.shape_cast %5 : vector<1x128xf32> to vector<1x128xf32>
    %7 = vector.broadcast %6 : vector<1x128xf32> to vector<8x128xf32>
    %c0_7 = arith.constant 0 : index
    %c0_8 = arith.constant 0 : index
    %8 = vector.load %arg0[%c0_7, %c0_8] : memref<8x8xf32, #tpu.memory_space<vmem>>, vector<8x8xf32>
    %cst = arith.constant dense<0.000000e+00> : vector<8x128xf32>
    %9 = tpu.matmul %8, %0, %cst {dimension_numbers = #tpu.dot_dimension_numbers<[1], [0], [0], [1], [0, 0, 1, 1], [], []>} : vector<8x8xf32>, vector<8x128xf32>, vector<8x128xf32> -> vector<8x128xf32>
    %10 = arith.addf %9, %4 : vector<8x128xf32>
    %cst_9 = arith.constant 0.000000e+00 : f32
    %11 = vector.broadcast %cst_9 : f32 to vector<8x32xf32>
    %12 = arith.negf %10 : vector<8x128xf32>
    %13 = math.exp %12 : vector<8x128xf32>
    %cst_10 = arith.constant 1.000000e+00 : f32
    %14 = vector.broadcast %cst_10 : f32 to vector<8x128xf32>
    %15 = arith.addf %14, %13 : vector<8x128xf32>
    %16 = arith.divf %14, %15 : vector<8x128xf32>
    %17 = vector.extract_strided_slice %16 {offsets = [0, 0], sizes = [8, 32], strides = [1, 1]} : vector<8x128xf32> to vector<8x32xf32>
    %18 = vector.extract_strided_slice %16 {offsets = [0, 32], sizes = [8, 32], strides = [1, 1]} : vector<8x128xf32> to vector<8x32xf32>
    %19 = vector.extract_strided_slice %10 {offsets = [0, 64], sizes = [8, 32], strides = [1, 1]} : vector<8x128xf32> to vector<8x32xf32>
    %20 = math.tanh %19 : vector<8x32xf32>
    %21 = vector.extract_strided_slice %16 {offsets = [0, 96], sizes = [8, 32], strides = [1, 1]} : vector<8x128xf32> to vector<8x32xf32>
    %22 = arith.mulf %18, %11 : vector<8x32xf32>
    %23 = arith.mulf %17, %20 : vector<8x32xf32>
    %24 = arith.addf %22, %23 : vector<8x32xf32>
    %25 = math.tanh %24 : vector<8x32xf32>
    %26 = arith.mulf %21, %25 : vector<8x32xf32>
    %c0_11 = arith.constant 0 : index
    %c0_12 = arith.constant 0 : index
    %c0_13 = arith.constant 0 : index
    %27 = vector.load %arg5[%c0_11, %c0_12, %c0_13] : memref<8x8x32xf32, #tpu.memory_space<vmem>>, vector<1x8x32xf32>
    %28 = vector.shape_cast %27 : vector<1x8x32xf32> to vector<8x32xf32>
    %29 = vector.shape_cast %26 : vector<8x32xf32> to vector<1x8x32xf32>
    tpu.vector_store %arg5[%c0_11, %c0_12, %c0_13], %29 {strides = array<i32>} : memref<8x8x32xf32, #tpu.memory_space<vmem>>, vector<1x8x32xf32>,
    %cst_14 = arith.constant dense<0.000000e+00> : vector<8x128xf32>
    %30 = tpu.matmul %26, %1, %cst_14 {dimension_numbers = #tpu.dot_dimension_numbers<[1], [0], [0], [1], [0, 0, 1, 1], [], []>} : vector<8x32xf32>, vector<32x128xf32>, vector<8x128xf32> -> vector<8x128xf32>
    %31 = arith.addf %30, %7 : vector<8x128xf32>
    %32 = arith.negf %31 : vector<8x128xf32>
    %33 = math.exp %32 : vector<8x128xf32>
    %cst_15 = arith.constant 1.000000e+00 : f32
    %34 = vector.broadcast %cst_15 : f32 to vector<8x128xf32>
    %35 = arith.addf %34, %33 : vector<8x128xf32>
    %36 = arith.divf %34, %35 : vector<8x128xf32>
    %37 = vector.extract_strided_slice %36 {offsets = [0, 0], sizes = [8, 32], strides = [1, 1]} : vector<8x128xf32> to vector<8x32xf32>
    %38 = vector.extract_strided_slice %36 {offsets = [0, 32], sizes = [8, 32], strides = [1, 1]} : vector<8x128xf32> to vector<8x32xf32>
    %39 = vector.extract_strided_slice %31 {offsets = [0, 64], sizes = [8, 32], strides = [1, 1]} : vector<8x128xf32> to vector<8x32xf32>
    %40 = math.tanh %39 : vector<8x32xf32>
    %41 = vector.extract_strided_slice %36 {offsets = [0, 96], sizes = [8, 32], strides = [1, 1]} : vector<8x128xf32> to vector<8x32xf32>
    %42 = arith.mulf %38, %24 : vector<8x32xf32>
    %43 = arith.mulf %37, %40 : vector<8x32xf32>
    %44 = arith.addf %42, %43 : vector<8x32xf32>
    %45 = math.tanh %44 : vector<8x32xf32>
    %46 = arith.mulf %41, %45 : vector<8x32xf32>
    %c7 = arith.constant 7 : index
    %c0_16 = arith.constant 0 : index
    %c0_17 = arith.constant 0 : index
    %47 = vector.load %arg5[%c7, %c0_16, %c0_17] : memref<8x8x32xf32, #tpu.memory_space<vmem>>, vector<1x8x32xf32>
    %48 = vector.shape_cast %47 : vector<1x8x32xf32> to vector<8x32xf32>
    %49 = vector.shape_cast %46 : vector<8x32xf32> to vector<1x8x32xf32>
    tpu.vector_store %arg5[%c7, %c0_16, %c0_17], %49 {strides = array<i32>} : memref<8x8x32xf32, #tpu.memory_space<vmem>>, vector<1x8x32xf32>,
    %cst_18 = arith.constant dense<0.000000e+00> : vector<8x128xf32>
    %50 = tpu.matmul %46, %1, %cst_18 {dimension_numbers = #tpu.dot_dimension_numbers<[1], [0], [0], [1], [0, 0, 1, 1], [], []>} : vector<8x32xf32>, vector<32x128xf32>, vector<8x128xf32> -> vector<8x128xf32>
    %51 = arith.addf %50, %7 : vector<8x128xf32>
    %52 = arith.negf %51 : vector<8x128xf32>
    %53 = math.exp %52 : vector<8x128xf32>
    %cst_19 = arith.constant 1.000000e+00 : f32
    %54 = vector.broadcast %cst_19 : f32 to vector<8x128xf32>
    %55 = arith.addf %54, %53 : vector<8x128xf32>
    %56 = arith.divf %54, %55 : vector<8x128xf32>
    %57 = vector.extract_strided_slice %56 {offsets = [0, 0], sizes = [8, 32], strides = [1, 1]} : vector<8x128xf32> to vector<8x32xf32>
    %58 = vector.extract_strided_slice %56 {offsets = [0, 32], sizes = [8, 32], strides = [1, 1]} : vector<8x128xf32> to vector<8x32xf32>
    %59 = vector.extract_strided_slice %51 {offsets = [0, 64], sizes = [8, 32], strides = [1, 1]} : vector<8x128xf32> to vector<8x32xf32>
    %60 = math.tanh %59 : vector<8x32xf32>
    %61 = vector.extract_strided_slice %56 {offsets = [0, 96], sizes = [8, 32], strides = [1, 1]} : vector<8x128xf32> to vector<8x32xf32>
    %62 = arith.mulf %58, %44 : vector<8x32xf32>
    %63 = arith.mulf %57, %60 : vector<8x32xf32>
    %64 = arith.addf %62, %63 : vector<8x32xf32>
    %65 = math.tanh %64 : vector<8x32xf32>
    %66 = arith.mulf %61, %65 : vector<8x32xf32>
    %c6 = arith.constant 6 : index
    %c0_20 = arith.constant 0 : index
    %c0_21 = arith.constant 0 : index
    %67 = vector.load %arg5[%c6, %c0_20, %c0_21] : memref<8x8x32xf32, #tpu.memory_space<vmem>>, vector<1x8x32xf32>
    %68 = vector.shape_cast %67 : vector<1x8x32xf32> to vector<8x32xf32>
    %69 = vector.shape_cast %66 : vector<8x32xf32> to vector<1x8x32xf32>
    tpu.vector_store %arg5[%c6, %c0_20, %c0_21], %69 {strides = array<i32>} : memref<8x8x32xf32, #tpu.memory_space<vmem>>, vector<1x8x32xf32>,
    %cst_22 = arith.constant dense<0.000000e+00> : vector<8x128xf32>
    %70 = tpu.matmul %66, %1, %cst_22 {dimension_numbers = #tpu.dot_dimension_numbers<[1], [0], [0], [1], [0, 0, 1, 1], [], []>} : vector<8x32xf32>, vector<32x128xf32>, vector<8x128xf32> -> vector<8x128xf32>
    %71 = arith.addf %70, %7 : vector<8x128xf32>
    %72 = arith.negf %71 : vector<8x128xf32>
    %73 = math.exp %72 : vector<8x128xf32>
    %cst_23 = arith.constant 1.000000e+00 : f32
    %74 = vector.broadcast %cst_23 : f32 to vector<8x128xf32>
    %75 = arith.addf %74, %73 : vector<8x128xf32>
    %76 = arith.divf %74, %75 : vector<8x128xf32>
    %77 = vector.extract_strided_slice %76 {offsets = [0, 0], sizes = [8, 32], strides = [1, 1]} : vector<8x128xf32> to vector<8x32xf32>
    %78 = vector.extract_strided_slice %76 {offsets = [0, 32], sizes = [8, 32], strides = [1, 1]} : vector<8x128xf32> to vector<8x32xf32>
    %79 = vector.extract_strided_slice %71 {offsets = [0, 64], sizes = [8, 32], strides = [1, 1]} : vector<8x128xf32> to vector<8x32xf32>
    %80 = math.tanh %79 : vector<8x32xf32>
    %81 = vector.extract_strided_slice %76 {offsets = [0, 96], sizes = [8, 32], strides = [1, 1]} : vector<8x128xf32> to vector<8x32xf32>
    %82 = arith.mulf %78, %64 : vector<8x32xf32>
    %83 = arith.mulf %77, %80 : vector<8x32xf32>
    %84 = arith.addf %82, %83 : vector<8x32xf32>
    %85 = math.tanh %84 : vector<8x32xf32>
    %86 = arith.mulf %81, %85 : vector<8x32xf32>
    %c5 = arith.constant 5 : index
    %c0_24 = arith.constant 0 : index
    %c0_25 = arith.constant 0 : index
    %87 = vector.load %arg5[%c5, %c0_24, %c0_25] : memref<8x8x32xf32, #tpu.memory_space<vmem>>, vector<1x8x32xf32>
    %88 = vector.shape_cast %87 : vector<1x8x32xf32> to vector<8x32xf32>
    %89 = vector.shape_cast %86 : vector<8x32xf32> to vector<1x8x32xf32>
    tpu.vector_store %arg5[%c5, %c0_24, %c0_25], %89 {strides = array<i32>} : memref<8x8x32xf32, #tpu.memory_space<vmem>>, vector<1x8x32xf32>,
    %cst_26 = arith.constant dense<0.000000e+00> : vector<8x128xf32>
    %90 = tpu.matmul %86, %1, %cst_26 {dimension_numbers = #tpu.dot_dimension_numbers<[1], [0], [0], [1], [0, 0, 1, 1], [], []>} : vector<8x32xf32>, vector<32x128xf32>, vector<8x128xf32> -> vector<8x128xf32>
    %91 = arith.addf %90, %7 : vector<8x128xf32>
    %92 = arith.negf %91 : vector<8x128xf32>
    %93 = math.exp %92 : vector<8x128xf32>
    %cst_27 = arith.constant 1.000000e+00 : f32
    %94 = vector.broadcast %cst_27 : f32 to vector<8x128xf32>
    %95 = arith.addf %94, %93 : vector<8x128xf32>
    %96 = arith.divf %94, %95 : vector<8x128xf32>
    %97 = vector.extract_strided_slice %96 {offsets = [0, 0], sizes = [8, 32], strides = [1, 1]} : vector<8x128xf32> to vector<8x32xf32>
    %98 = vector.extract_strided_slice %96 {offsets = [0, 32], sizes = [8, 32], strides = [1, 1]} : vector<8x128xf32> to vector<8x32xf32>
    %99 = vector.extract_strided_slice %91 {offsets = [0, 64], sizes = [8, 32], strides = [1, 1]} : vector<8x128xf32> to vector<8x32xf32>
    %100 = math.tanh %99 : vector<8x32xf32>
    %101 = vector.extract_strided_slice %96 {offsets = [0, 96], sizes = [8, 32], strides = [1, 1]} : vector<8x128xf32> to vector<8x32xf32>
    %102 = arith.mulf %98, %84 : vector<8x32xf32>
    %103 = arith.mulf %97, %100 : vector<8x32xf32>
    %104 = arith.addf %102, %103 : vector<8x32xf32>
    %105 = math.tanh %104 : vector<8x32xf32>
    %106 = arith.mulf %101, %105 : vector<8x32xf32>
    %c4 = arith.constant 4 : index
    %c0_28 = arith.constant 0 : index
    %c0_29 = arith.constant 0 : index
    %107 = vector.load %arg5[%c4, %c0_28, %c0_29] : memref<8x8x32xf32, #tpu.memory_space<vmem>>, vector<1x8x32xf32>
    %108 = vector.shape_cast %107 : vector<1x8x32xf32> to vector<8x32xf32>
    %109 = vector.shape_cast %106 : vector<8x32xf32> to vector<1x8x32xf32>
    tpu.vector_store %arg5[%c4, %c0_28, %c0_29], %109 {strides = array<i32>} : memref<8x8x32xf32, #tpu.memory_space<vmem>>, vector<1x8x32xf32>,
    %cst_30 = arith.constant dense<0.000000e+00> : vector<8x128xf32>
    %110 = tpu.matmul %106, %1, %cst_30 {dimension_numbers = #tpu.dot_dimension_numbers<[1], [0], [0], [1], [0, 0, 1, 1], [], []>} : vector<8x32xf32>, vector<32x128xf32>, vector<8x128xf32> -> vector<8x128xf32>
    %111 = arith.addf %110, %7 : vector<8x128xf32>
    %112 = arith.negf %111 : vector<8x128xf32>
    %113 = math.exp %112 : vector<8x128xf32>
    %cst_31 = arith.constant 1.000000e+00 : f32
    %114 = vector.broadcast %cst_31 : f32 to vector<8x128xf32>
    %115 = arith.addf %114, %113 : vector<8x128xf32>
    %116 = arith.divf %114, %115 : vector<8x128xf32>
    %117 = vector.extract_strided_slice %116 {offsets = [0, 0], sizes = [8, 32], strides = [1, 1]} : vector<8x128xf32> to vector<8x32xf32>
    %118 = vector.extract_strided_slice %116 {offsets = [0, 32], sizes = [8, 32], strides = [1, 1]} : vector<8x128xf32> to vector<8x32xf32>
    %119 = vector.extract_strided_slice %111 {offsets = [0, 64], sizes = [8, 32], strides = [1, 1]} : vector<8x128xf32> to vector<8x32xf32>
    %120 = math.tanh %119 : vector<8x32xf32>
    %121 = vector.extract_strided_slice %116 {offsets = [0, 96], sizes = [8, 32], strides = [1, 1]} : vector<8x128xf32> to vector<8x32xf32>
    %122 = arith.mulf %118, %104 : vector<8x32xf32>
    %123 = arith.mulf %117, %120 : vector<8x32xf32>
    %124 = arith.addf %122, %123 : vector<8x32xf32>
    %125 = math.tanh %124 : vector<8x32xf32>
    %126 = arith.mulf %121, %125 : vector<8x32xf32>
    %c3 = arith.constant 3 : index
    %c0_32 = arith.constant 0 : index
    %c0_33 = arith.constant 0 : index
    %127 = vector.load %arg5[%c3, %c0_32, %c0_33] : memref<8x8x32xf32, #tpu.memory_space<vmem>>, vector<1x8x32xf32>
    %128 = vector.shape_cast %127 : vector<1x8x32xf32> to vector<8x32xf32>
    %129 = vector.shape_cast %126 : vector<8x32xf32> to vector<1x8x32xf32>
    tpu.vector_store %arg5[%c3, %c0_32, %c0_33], %129 {strides = array<i32>} : memref<8x8x32xf32, #tpu.memory_space<vmem>>, vector<1x8x32xf32>,
    %cst_34 = arith.constant dense<0.000000e+00> : vector<8x128xf32>
    %130 = tpu.matmul %126, %1, %cst_34 {dimension_numbers = #tpu.dot_dimension_numbers<[1], [0], [0], [1], [0, 0, 1, 1], [], []>} : vector<8x32xf32>, vector<32x128xf32>, vector<8x128xf32> -> vector<8x128xf32>
    %131 = arith.addf %130, %7 : vector<8x128xf32>
    %132 = arith.negf %131 : vector<8x128xf32>
    %133 = math.exp %132 : vector<8x128xf32>
    %cst_35 = arith.constant 1.000000e+00 : f32
    %134 = vector.broadcast %cst_35 : f32 to vector<8x128xf32>
    %135 = arith.addf %134, %133 : vector<8x128xf32>
    %136 = arith.divf %134, %135 : vector<8x128xf32>
    %137 = vector.extract_strided_slice %136 {offsets = [0, 0], sizes = [8, 32], strides = [1, 1]} : vector<8x128xf32> to vector<8x32xf32>
    %138 = vector.extract_strided_slice %136 {offsets = [0, 32], sizes = [8, 32], strides = [1, 1]} : vector<8x128xf32> to vector<8x32xf32>
    %139 = vector.extract_strided_slice %131 {offsets = [0, 64], sizes = [8, 32], strides = [1, 1]} : vector<8x128xf32> to vector<8x32xf32>
    %140 = math.tanh %139 : vector<8x32xf32>
    %141 = vector.extract_strided_slice %136 {offsets = [0, 96], sizes = [8, 32], strides = [1, 1]} : vector<8x128xf32> to vector<8x32xf32>
    %142 = arith.mulf %138, %124 : vector<8x32xf32>
    %143 = arith.mulf %137, %140 : vector<8x32xf32>
    %144 = arith.addf %142, %143 : vector<8x32xf32>
    %145 = math.tanh %144 : vector<8x32xf32>
    %146 = arith.mulf %141, %145 : vector<8x32xf32>
    %c2 = arith.constant 2 : index
    %c0_36 = arith.constant 0 : index
    %c0_37 = arith.constant 0 : index
    %147 = vector.load %arg5[%c2, %c0_36, %c0_37] : memref<8x8x32xf32, #tpu.memory_space<vmem>>, vector<1x8x32xf32>
    %148 = vector.shape_cast %147 : vector<1x8x32xf32> to vector<8x32xf32>
    %149 = vector.shape_cast %146 : vector<8x32xf32> to vector<1x8x32xf32>
    tpu.vector_store %arg5[%c2, %c0_36, %c0_37], %149 {strides = array<i32>} : memref<8x8x32xf32, #tpu.memory_space<vmem>>, vector<1x8x32xf32>,
    %cst_38 = arith.constant dense<0.000000e+00> : vector<8x128xf32>
    %150 = tpu.matmul %146, %1, %cst_38 {dimension_numbers = #tpu.dot_dimension_numbers<[1], [0], [0], [1], [0, 0, 1, 1], [], []>} : vector<8x32xf32>, vector<32x128xf32>, vector<8x128xf32> -> vector<8x128xf32>
    %151 = arith.addf %150, %7 : vector<8x128xf32>
    %152 = arith.negf %151 : vector<8x128xf32>
    %153 = math.exp %152 : vector<8x128xf32>
    %cst_39 = arith.constant 1.000000e+00 : f32
    %154 = vector.broadcast %cst_39 : f32 to vector<8x128xf32>
    %155 = arith.addf %154, %153 : vector<8x128xf32>
    %156 = arith.divf %154, %155 : vector<8x128xf32>
    %157 = vector.extract_strided_slice %156 {offsets = [0, 0], sizes = [8, 32], strides = [1, 1]} : vector<8x128xf32> to vector<8x32xf32>
    %158 = vector.extract_strided_slice %156 {offsets = [0, 32], sizes = [8, 32], strides = [1, 1]} : vector<8x128xf32> to vector<8x32xf32>
    %159 = vector.extract_strided_slice %151 {offsets = [0, 64], sizes = [8, 32], strides = [1, 1]} : vector<8x128xf32> to vector<8x32xf32>
    %160 = math.tanh %159 : vector<8x32xf32>
    %161 = vector.extract_strided_slice %156 {offsets = [0, 96], sizes = [8, 32], strides = [1, 1]} : vector<8x128xf32> to vector<8x32xf32>
    %162 = arith.mulf %158, %144 : vector<8x32xf32>
    %163 = arith.mulf %157, %160 : vector<8x32xf32>
    %164 = arith.addf %162, %163 : vector<8x32xf32>
    %165 = math.tanh %164 : vector<8x32xf32>
    %166 = arith.mulf %161, %165 : vector<8x32xf32>
    %c1 = arith.constant 1 : index
    %c0_40 = arith.constant 0 : index
    %c0_41 = arith.constant 0 : index
    %167 = vector.load %arg5[%c1, %c0_40, %c0_41] : memref<8x8x32xf32, #tpu.memory_space<vmem>>, vector<1x8x32xf32>
    %168 = vector.shape_cast %167 : vector<1x8x32xf32> to vector<8x32xf32>
    %169 = vector.shape_cast %166 : vector<8x32xf32> to vector<1x8x32xf32>
    tpu.vector_store %arg5[%c1, %c0_40, %c0_41], %169 {strides = array<i32>} : memref<8x8x32xf32, #tpu.memory_space<vmem>>, vector<1x8x32xf32>,
    %c0_42 = arith.constant 0 : index
    %c0_43 = arith.constant 0 : index
    %170 = vector.load %arg6[%c0_42, %c0_43] : memref<8x32xf32, #tpu.memory_space<vmem>>, vector<8x32xf32>
    tpu.vector_store %arg6[%c0_42, %c0_43], %166 {strides = array<i32>} : memref<8x32xf32, #tpu.memory_space<vmem>>, vector<8x32xf32>,
    %c0_44 = arith.constant 0 : index
    %c0_45 = arith.constant 0 : index
    %171 = vector.load %arg7[%c0_44, %c0_45] : memref<8x32xf32, #tpu.memory_space<vmem>>, vector<8x32xf32>
    tpu.vector_store %arg7[%c0_44, %c0_45], %164 {strides = array<i32>} : memref<8x32xf32, #tpu.memory_space<vmem>>, vector<8x32xf32>,
    return
  }
}

</mosaic_0001>

<llo_original>
// kernel: tpu_custom_call.1
$region0: #{tpu_custom_call.1}
  #allocation0 [shape = 'u32[]', space=smem, size = 0x4, offset = 0x4, fixed_abs, tag = 'smem constant byte address 0x4 - core index']
  #allocation1 [shape = 'u32[72,128]{1,0:T(1,128)}', space=vmem, size = 0x9000, scoped, tag = 'internal scratch']
  %s0 = inlined_call_operand.hbm [shape: f32[8,8], index: 0, kind: input, shape index: {}]
  %s1 = inlined_call_operand.hbm [shape: f32[8,128], index: 1, kind: input, shape index: {}]
  %s2 = inlined_call_operand.hbm [shape: f32[32,128], index: 2, kind: input, shape index: {}]
  %s3 = inlined_call_operand.vmem [shape: f32[1,128], index: 3, kind: input, shape index: {}]
  %s4 = inlined_call_operand.vmem [shape: f32[1,128], index: 4, kind: input, shape index: {}]
  %s5 = inlined_call_operand.hbm [shape: f32[8,8,32], index: 5, kind: output, shape index: {0}]
  %s6 = inlined_call_operand.hbm [shape: f32[8,32], index: 6, kind: output, shape index: {1}]
  %s7 = inlined_call_operand.hbm [shape: f32[8,32], index: 7, kind: output, shape index: {2}]
  %8 = xla_tuple %s5, %s6, %s7
  %s9 = sld [smem:[#allocation0]]
  $region58: #{tpu_custom_call.1} parent=0
    _
  %s11 = ssub.s32 1, %s9
  %s12 = scalar_select 0, %s11, %s9
  $region1: #{tpu_custom_call.1} parent=0
    #allocation2 [shape = 'u8[4096]{0}', space=vmem, size = 0x1000, scoped, tag = 'input window, operand 0, single buffered']
    #allocation3 [shape = 's32[1]{0}', space=sflag, size = 0x4, scoped, tag = 'scoped memory for tpu_custom_call.1']
    #allocation4 [shape = 's32[1]{0}', space=sflag, size = 0x4, scoped, tag = 'scoped memory for tpu_custom_call.1']
    #allocation5 [shape = 'u8[4096]{0}', space=vmem, size = 0x1000, scoped, tag = 'input window, operand 1, single buffered']
    #allocation6 [shape = 's32[1]{0}', space=sflag, size = 0x4, scoped, tag = 'scoped memory for tpu_custom_call.1']
    #allocation7 [shape = 'u8[16384]{0}', space=vmem, size = 0x4000, scoped, tag = 'input window, operand 2, single buffered']
    #allocation8 [shape = 'u8[32768]{0}', space=vmem, size = 0x8000, scoped, tag = 'output window, operand 0, single buffered']
    #allocation9 [shape = 'u8[4096]{0}', space=vmem, size = 0x1000, scoped, tag = 'output window, operand 1, single buffered']
    #allocation10 [shape = 's32[1]{0}', space=sflag, size = 0x4, scoped, tag = 'scoped memory for tpu_custom_call.1']
    #allocation11 [shape = 'u8[4096]{0}', space=vmem, size = 0x1000, scoped, tag = 'output window, operand 2, single buffered']
    %13 = vsyncpa [#allocation3], 0
    %14 = vsyncpa [#allocation6], 0
    %15 = vsyncpa [#allocation4], 0
    %16 = vsyncpa [#allocation10], 0
    // Predicated region
    $region2: #{tpu_custom_call.1} parent=1 // pred_check
      _
    $region3: #{tpu_custom_call.1} parent=1 // pred_check_branch
      %18 = sbr.rel (0) target = $region5
    $region4: #{tpu_custom_call.1} parent=1 // pred_region
      %20 = vsyncadd [#allocation3], 0
      %s22 = sshll.u32 %s0, 4
      %s23 = int_to_ptr.hbm [resolvable:$true] %s22
      %s24 = sshll.u32 [#allocation2], 4
      %s25 = int_to_ptr.vmem [resolvable:$true] %s24
      %27 = dma.hbm_to_vmem [thread:$0]  %s23, 128, %s25, [#allocation3]
    $region5: #{tpu_custom_call.1} parent=1 // pred_fallthru
      _
    // Predicated region
    $region6: #{tpu_custom_call.1} parent=1 // pred_check
      _
    $region7: #{tpu_custom_call.1} parent=1 // pred_check_branch
      %29 = sbr.rel (0) target = $region9
    $region8: #{tpu_custom_call.1} parent=1 // pred_region
      %31 = vsyncadd [#allocation6], 0
      %s33 = sshll.u32 %s1, 4
      %s34 = int_to_ptr.hbm [resolvable:$true] %s33
      %s35 = sshll.u32 [#allocation5], 4
      %s36 = int_to_ptr.vmem [resolvable:$true] %s35
      %38 = dma.hbm_to_vmem [thread:$0]  %s34, 128, %s36, [#allocation6]
    $region9: #{tpu_custom_call.1} parent=1 // pred_fallthru
      _
    // Predicated region
    $region10: #{tpu_custom_call.1} parent=1 // pred_check
      _
    $region11: #{tpu_custom_call.1} parent=1 // pred_check_branch
      %40 = sbr.rel (0) target = $region13
    $region12: #{tpu_custom_call.1} parent=1 // pred_region
      %42 = vsyncadd [#allocation6], 0
      %s43 = sshll.u32 %s2, 4
      %s44 = int_to_ptr.hbm [resolvable:$true] %s43
      %s45 = sshll.u32 [#allocation7], 4
      %s46 = int_to_ptr.vmem [resolvable:$true] %s45
      %51 = dma.hbm_to_vmem [thread:$0]  %s44, 512, %s46, [#allocation6], 128, 128, 8
    $region13: #{tpu_custom_call.1} parent=1 // pred_fallthru
      _
    // Predicated region
    $region14: #{tpu_custom_call.1} parent=1 // pred_check
      _
    $region15: #{tpu_custom_call.1} parent=1 // pred_check_branch
      %53 = sbr.rel (0) target = $region17
    $region16: #{tpu_custom_call.1} parent=1 // pred_region
      _
    $region17: #{tpu_custom_call.1} parent=1 // pred_fallthru
      _
    // Predicated region
    $region18: #{tpu_custom_call.1} parent=1 // pred_check
      _
    $region19: #{tpu_custom_call.1} parent=1 // pred_check_branch
      %55 = sbr.rel (0) target = $region21
    $region20: #{tpu_custom_call.1} parent=1 // pred_region
      _
    $region21: #{tpu_custom_call.1} parent=1 // pred_fallthru
      _
    // Predicated region
    $region22: #{tpu_custom_call.1} parent=1 // pred_check
      _
    $region23: #{tpu_custom_call.1} parent=1 // pred_check_branch
      %57 = sbr.rel (0) target = $region25
    $region24: #{tpu_custom_call.1} parent=1 // pred_region
      %59 = dma.done [#allocation3], 128
    $region25: #{tpu_custom_call.1} parent=1 // pred_fallthru
      _
    // Predicated region
    $region26: #{tpu_custom_call.1} parent=1 // pred_check
      _
    $region27: #{tpu_custom_call.1} parent=1 // pred_check_branch
      %61 = sbr.rel (0) target = $region29
    $region28: #{tpu_custom_call.1} parent=1 // pred_region
      %63 = dma.done [#allocation6], 128
    $region29: #{tpu_custom_call.1} parent=1 // pred_fallthru
      _
    // Predicated region
    $region30: #{tpu_custom_call.1} parent=1 // pred_check
      _
    $region31: #{tpu_custom_call.1} parent=1 // pred_check_branch
      %65 = sbr.rel (0) target = $region33
    $region32: #{tpu_custom_call.1} parent=1 // pred_region
      %67 = dma.done [#allocation6], 512
    $region33: #{tpu_custom_call.1} parent=1 // pred_fallthru
      _
    %v68 = vld [vmem:[#allocation5] sm:$0xff]
    %v69 = vld [vmem:[#allocation7] sm:$0xff]
    %v70 = vld [vmem:[#allocation7 + $0x8] sm:$0xff]
    %v71 = vld [vmem:[#allocation7 + $0x10] sm:$0xff]
    %v72 = vld [vmem:[#allocation7 + $0x18] sm:$0xff]
    %v73 = vld [vmem:[%s3] sm:$0x1]
    %v75 = vperm.slane %v73, 0
    %v77 = vld [vmem:[%s4] sm:$0x1]
    %v79 = vperm.slane %v77, 0
    %v81 = vld [vmem:[#allocation2] sm:$0xff]
    %vm82 = vcmask 64512
    %v84 = vsel %vm82, %v81, 0
    %86 = vmatpush.msra.mxu0 0.0
    %87 = vmatpush.msra.mxu0 0.0
    %88 = vmatpush.msra.mxu0 0.0
    %89 = vmatpush.msra.mxu0 0.0
    %90 = vmatpush.msra.mxu0 0.0
    %91 = vmatpush.msra.mxu0 0.0
    %92 = vmatpush.msra.mxu0 0.0
    %93 = vmatpush.msra.mxu0 0.0
    %94 = vmatpush.msra.mxu0 0.0
    %95 = vmatpush.msra.mxu0 0.0
    %96 = vmatpush.msra.mxu0 0.0
    %97 = vmatpush.msra.mxu0 0.0
    %98 = vmatpush.msra.mxu0 0.0
    %99 = vmatpush.msra.mxu0 0.0
    %100 = vmatpush.msra.mxu0 0.0
    %101 = vmatpush.msra.mxu0 %v68
    %102 = vmatmul.f32.gmra.mxu0 %v84
    %v103 = vpop.f32.mrf.mxu0
    %v104 = vadd.f32 %v75, %v103
    %105 = vdwg.mxu0
    %v106 = vxor.u32 %v104, 2147483648
    %v107 = vmul.f32 %v106, 1.442695
    %v108 = vpow.pop %v107
    %v109 = vadd.f32 %v108, 1.0
    %v110 = vrcp.pop %v109
    %v111 = vmul.f32 %v109, %v110
    %v112 = vsub.f32 1.0, %v111
    %v113 = vmul.f32 %v110, %v112
    %v114 = vadd.f32 %v110, %v113
    %vm115 = vweird.f32 %v109
    %vm116 = vweird.f32 %v110
    %vm117 = vmor %vm115, %vm116
    %v118 = vsel %vm117, %v110, %v114
    %v119 = vand.u32 2147483647, %v109
    %vm120 = vcmp.eq.f32.partialorder %v119, 8.507059e+37
    %v121 = vand.u32 %v109, 2147483648
    %v122 = vor.u32 1.1754944e-38, %v121
    %v123 = vsel %vm120, %v122, %v118
    %v124 = vmul.f32 1.0, %v123
    %v125 = vtanh.pop %v104
    %v126 = vmul.f32 %v124, 0.0
    %128 = vrot.lane.b32.xlu0 %v125, 64
    %v129 = vpop.permute.xlu0 %128
    %v131 = vmul.f32 %v124, %v129
    %133 = vrot.lane.b32.xlu0 %v131, 32
    %v134 = vpop.permute.xlu0 %133
    %v136 = vadd.f32 %v126, %v134
    %v137 = vtanh.pop %v136
    %139 = vrot.lane.b32.xlu0 %v137, 64
    %v140 = vpop.permute.xlu0 %139
    %v142 = vmul.f32 %v124, %v140
    %144 = vrot.lane.b32.xlu0 %v142, 32
    %v145 = vpop.permute.xlu0 %144
    %vm147 = vcmask 261120
    %148 = vst.msk [vmem:[#allocation8] sm:$0xff] %vm147, %v145
    %v149 = vsel %vm147, %v145, 0
    %151 = vmatpush.msra.mxu0 0.0
    %152 = vmatpush.msra.mxu0 0.0
    %153 = vmatpush.msra.mxu0 0.0
    %154 = vmatpush.msra.mxu0 0.0
    %155 = vmatpush.msra.mxu0 0.0
    %156 = vmatpush.msra.mxu0 0.0
    %157 = vmatpush.msra.mxu0 0.0
    %158 = vmatpush.msra.mxu0 0.0
    %159 = vmatpush.msra.mxu0 0.0
    %160 = vmatpush.msra.mxu0 0.0
    %161 = vmatpush.msra.mxu0 0.0
    %162 = vmatpush.msra.mxu0 0.0
    %163 = vmatpush.msra.mxu0 %v72
    %164 = vmatpush.msra.mxu0 %v71
    %165 = vmatpush.msra.mxu0 %v70
    %166 = vmatpush.msra.mxu0 %v69
    %167 = vmatmul.f32.gmra.mxu0 %v149
    %v168 = vpop.f32.mrf.mxu0
    %v169 = vadd.f32 %v79, %v168
    %170 = vdwg.mxu0
    %v171 = vxor.u32 %v169, 2147483648
    %v172 = vmul.f32 %v171, 1.442695
    %v173 = vpow.pop %v172
    %v174 = vadd.f32 %v173, 1.0
    %v175 = vrcp.pop %v174
    %v176 = vmul.f32 %v174, %v175
    %v177 = vsub.f32 1.0, %v176
    %v178 = vmul.f32 %v175, %v177
    %v179 = vadd.f32 %v175, %v178
    %vm180 = vweird.f32 %v174
    %vm181 = vweird.f32 %v175
    %vm182 = vmor %vm180, %vm181
    %v183 = vsel %vm182, %v175, %v179
    %v184 = vand.u32 2147483647, %v174
    %vm185 = vcmp.eq.f32.partialorder %v184, 8.507059e+37
    %v186 = vand.u32 %v174, 2147483648
    %v187 = vor.u32 1.1754944e-38, %v186
    %v188 = vsel %vm185, %v187, %v183
    %v189 = vmul.f32 1.0, %v188
    %v190 = vtanh.pop %v169
    %v191 = vmul.f32 %v189, %v136
    %193 = vrot.lane.b32.xlu0 %v190, 64
    %v194 = vpop.permute.xlu0 %193
    %v196 = vmul.f32 %v189, %v194
    %198 = vrot.lane.b32.xlu0 %v196, 32
    %v199 = vpop.permute.xlu0 %198
    %v201 = vadd.f32 %v191, %v199
    %v202 = vtanh.pop %v201
    %204 = vrot.lane.b32.xlu0 %v202, 64
    %v205 = vpop.permute.xlu0 %204
    %v207 = vmul.f32 %v189, %v205
    %209 = vrot.lane.b32.xlu0 %v207, 32
    %v210 = vpop.permute.xlu0 %209
    %s212 = scalar_lea.vmem [#allocation8], 56
    %213 = vst.msk [vmem:[%s212] sm:$0xff] %vm147, %v210
    %v214 = vsel %vm147, %v210, 0
    %216 = vmatpush.msra.mxu0 0.0
    %217 = vmatpush.msra.mxu0 0.0
    %218 = vmatpush.msra.mxu0 0.0
    %219 = vmatpush.msra.mxu0 0.0
    %220 = vmatpush.msra.mxu0 0.0
    %221 = vmatpush.msra.mxu0 0.0
    %222 = vmatpush.msra.mxu0 0.0
    %223 = vmatpush.msra.mxu0 0.0
    %224 = vmatpush.msra.mxu0 0.0
    %225 = vmatpush.msra.mxu0 0.0
    %226 = vmatpush.msra.mxu0 0.0
    %227 = vmatpush.msra.mxu0 0.0
    %228 = vmatpush.msra.mxu0 %v72
    %229 = vmatpush.msra.mxu0 %v71
    %230 = vmatpush.msra.mxu0 %v70
    %231 = vmatpush.msra.mxu0 %v69
    %232 = vmatmul.f32.gmra.mxu0 %v214
    %v233 = vpop.f32.mrf.mxu0
    %v234 = vadd.f32 %v79, %v233
    %235 = vdwg.mxu0
    %v236 = vxor.u32 %v234, 2147483648
    %v237 = vmul.f32 %v236, 1.442695
    %v238 = vpow.pop %v237
    %v239 = vadd.f32 %v238, 1.0
    %v240 = vrcp.pop %v239
    %v241 = vmul.f32 %v239, %v240
    %v242 = vsub.f32 1.0, %v241
    %v243 = vmul.f32 %v240, %v242
    %v244 = vadd.f32 %v240, %v243
    %vm245 = vweird.f32 %v239
    %vm246 = vweird.f32 %v240
    %vm247 = vmor %vm245, %vm246
    %v248 = vsel %vm247, %v240, %v244
    %v249 = vand.u32 2147483647, %v239
    %vm250 = vcmp.eq.f32.partialorder %v249, 8.507059e+37
    %v251 = vand.u32 %v239, 2147483648
    %v252 = vor.u32 1.1754944e-38, %v251
    %v253 = vsel %vm250, %v252, %v248
    %v254 = vmul.f32 1.0, %v253
    %v255 = vtanh.pop %v234
    %v256 = vmul.f32 %v254, %v201
    %258 = vrot.lane.b32.xlu0 %v255, 64
    %v259 = vpop.permute.xlu0 %258
    %v261 = vmul.f32 %v254, %v259
    %263 = vrot.lane.b32.xlu0 %v261, 32
    %v264 = vpop.permute.xlu0 %263
    %v266 = vadd.f32 %v256, %v264
    %v267 = vtanh.pop %v266
    %269 = vrot.lane.b32.xlu0 %v267, 64
    %v270 = vpop.permute.xlu0 %269
    %v272 = vmul.f32 %v254, %v270
    %274 = vrot.lane.b32.xlu0 %v272, 32
    %v275 = vpop.permute.xlu0 %274
    %s277 = scalar_lea.vmem [#allocation8], 48
    %278 = vst.msk [vmem:[%s277] sm:$0xff] %vm147, %v275
    %v279 = vsel %vm147, %v275, 0
    %281 = vmatpush.msra.mxu0 0.0
    %282 = vmatpush.msra.mxu0 0.0
    %283 = vmatpush.msra.mxu0 0.0
    %284 = vmatpush.msra.mxu0 0.0
    %285 = vmatpush.msra.mxu0 0.0
    %286 = vmatpush.msra.mxu0 0.0
    %287 = vmatpush.msra.mxu0 0.0
    %288 = vmatpush.msra.mxu0 0.0
    %289 = vmatpush.msra.mxu0 0.0
    %290 = vmatpush.msra.mxu0 0.0
    %291 = vmatpush.msra.mxu0 0.0
    %292 = vmatpush.msra.mxu0 0.0
    %293 = vmatpush.msra.mxu0 %v72
    %294 = vmatpush.msra.mxu0 %v71
    %295 = vmatpush.msra.mxu0 %v70
    %296 = vmatpush.msra.mxu0 %v69
    %297 = vmatmul.f32.gmra.mxu0 %v279
    %v298 = vpop.f32.mrf.mxu0
    %v299 = vadd.f32 %v79, %v298
    %300 = vdwg.mxu0
    %v301 = vxor.u32 %v299, 2147483648
    %v302 = vmul.f32 %v301, 1.442695
    %v303 = vpow.pop %v302
    %v304 = vadd.f32 %v303, 1.0
    %v305 = vrcp.pop %v304
    %v306 = vmul.f32 %v304, %v305
    %v307 = vsub.f32 1.0, %v306
    %v308 = vmul.f32 %v305, %v307
    %v309 = vadd.f32 %v305, %v308
    %vm310 = vweird.f32 %v304
    %vm311 = vweird.f32 %v305
    %vm312 = vmor %vm310, %vm311
    %v313 = vsel %vm312, %v305, %v309
    %v314 = vand.u32 2147483647, %v304
    %vm315 = vcmp.eq.f32.partialorder %v314, 8.507059e+37
    %v316 = vand.u32 %v304, 2147483648
    %v317 = vor.u32 1.1754944e-38, %v316
    %v318 = vsel %vm315, %v317, %v313
    %v319 = vmul.f32 1.0, %v318
    %v320 = vtanh.pop %v299
    %v321 = vmul.f32 %v319, %v266
    %323 = vrot.lane.b32.xlu0 %v320, 64
    %v324 = vpop.permute.xlu0 %323
    %v326 = vmul.f32 %v319, %v324
    %328 = vrot.lane.b32.xlu0 %v326, 32
    %v329 = vpop.permute.xlu0 %328
    %v331 = vadd.f32 %v321, %v329
    %v332 = vtanh.pop %v331
    %334 = vrot.lane.b32.xlu0 %v332, 64
    %v335 = vpop.permute.xlu0 %334
    %v337 = vmul.f32 %v319, %v335
    %339 = vrot.lane.b32.xlu0 %v337, 32
    %v340 = vpop.permute.xlu0 %339
    %s342 = scalar_lea.vmem [#allocation8], 40
    %343 = vst.msk [vmem:[%s342] sm:$0xff] %vm147, %v340
    %v344 = vsel %vm147, %v340, 0
    %346 = vmatpush.msra.mxu0 0.0
    %347 = vmatpush.msra.mxu0 0.0
    %348 = vmatpush.msra.mxu0 0.0
    %349 = vmatpush.msra.mxu0 0.0
    %350 = vmatpush.msra.mxu0 0.0
    %351 = vmatpush.msra.mxu0 0.0
    %352 = vmatpush.msra.mxu0 0.0
    %353 = vmatpush.msra.mxu0 0.0
    %354 = vmatpush.msra.mxu0 0.0
    %355 = vmatpush.msra.mxu0 0.0
    %356 = vmatpush.msra.mxu0 0.0
    %357 = vmatpush.msra.mxu0 0.0
    %358 = vmatpush.msra.mxu0 %v72
    %359 = vmatpush.msra.mxu0 %v71
    %360 = vmatpush.msra.mxu0 %v70
    %361 = vmatpush.msra.mxu0 %v69
    %362 = vmatmul.f32.gmra.mxu0 %v344
    %v363 = vpop.f32.mrf.mxu0
    %v364 = vadd.f32 %v79, %v363
    %365 = vdwg.mxu0
    %v366 = vxor.u32 %v364, 2147483648
    %v367 = vmul.f32 %v366, 1.442695
    %v368 = vpow.pop %v367
    %v369 = vadd.f32 %v368, 1.0
    %v370 = vrcp.pop %v369
    %v371 = vmul.f32 %v369, %v370
    %v372 = vsub.f32 1.0, %v371
    %v373 = vmul.f32 %v370, %v372
    %v374 = vadd.f32 %v370, %v373
    %vm375 = vweird.f32 %v369
    %vm376 = vweird.f32 %v370
    %vm377 = vmor %vm375, %vm376
    %v378 = vsel %vm377, %v370, %v374
    %v379 = vand.u32 2147483647, %v369
    %vm380 = vcmp.eq.f32.partialorder %v379, 8.507059e+37
    %v381 = vand.u32 %v369, 2147483648
    %v382 = vor.u32 1.1754944e-38, %v381
    %v383 = vsel %vm380, %v382, %v378
    %v384 = vmul.f32 1.0, %v383
    %v385 = vtanh.pop %v364
    %v386 = vmul.f32 %v384, %v331
    %388 = vrot.lane.b32.xlu0 %v385, 64
    %v389 = vpop.permute.xlu0 %388
    %v391 = vmul.f32 %v384, %v389
    %393 = vrot.lane.b32.xlu0 %v391, 32
    %v394 = vpop.permute.xlu0 %393
    %v396 = vadd.f32 %v386, %v394
    %v397 = vtanh.pop %v396
    %399 = vrot.lane.b32.xlu0 %v397, 64
    %v400 = vpop.permute.xlu0 %399
    %v402 = vmul.f32 %v384, %v400
    %404 = vrot.lane.b32.xlu0 %v402, 32
    %v405 = vpop.permute.xlu0 %404
    %s407 = scalar_lea.vmem [#allocation8], 32
    %408 = vst.msk [vmem:[%s407] sm:$0xff] %vm147, %v405
    %v409 = vsel %vm147, %v405, 0
    %411 = vmatpush.msra.mxu0 0.0
    %412 = vmatpush.msra.mxu0 0.0
    %413 = vmatpush.msra.mxu0 0.0
    %414 = vmatpush.msra.mxu0 0.0
    %415 = vmatpush.msra.mxu0 0.0
    %416 = vmatpush.msra.mxu0 0.0
    %417 = vmatpush.msra.mxu0 0.0
    %418 = vmatpush.msra.mxu0 0.0
    %419 = vmatpush.msra.mxu0 0.0
    %420 = vmatpush.msra.mxu0 0.0
    %421 = vmatpush.msra.mxu0 0.0
    %422 = vmatpush.msra.mxu0 0.0
    %423 = vmatpush.msra.mxu0 %v72
    %424 = vmatpush.msra.mxu0 %v71
    %425 = vmatpush.msra.mxu0 %v70
    %426 = vmatpush.msra.mxu0 %v69
    %427 = vmatmul.f32.gmra.mxu0 %v409
    %v428 = vpop.f32.mrf.mxu0
    %v429 = vadd.f32 %v79, %v428
    %430 = vdwg.mxu0
    %v431 = vxor.u32 %v429, 2147483648
    %v432 = vmul.f32 %v431, 1.442695
    %v433 = vpow.pop %v432
    %v434 = vadd.f32 %v433, 1.0
    %v435 = vrcp.pop %v434
    %v436 = vmul.f32 %v434, %v435
    %v437 = vsub.f32 1.0, %v436
    %v438 = vmul.f32 %v435, %v437
    %v439 = vadd.f32 %v435, %v438
    %vm440 = vweird.f32 %v434
    %vm441 = vweird.f32 %v435
    %vm442 = vmor %vm440, %vm441
    %v443 = vsel %vm442, %v435, %v439
    %v444 = vand.u32 2147483647, %v434
    %vm445 = vcmp.eq.f32.partialorder %v444, 8.507059e+37
    %v446 = vand.u32 %v434, 2147483648
    %v447 = vor.u32 1.1754944e-38, %v446
    %v448 = vsel %vm445, %v447, %v443
    %v449 = vmul.f32 1.0, %v448
    %v450 = vtanh.pop %v429
    %v451 = vmul.f32 %v449, %v396
    %453 = vrot.lane.b32.xlu0 %v450, 64
    %v454 = vpop.permute.xlu0 %453
    %v456 = vmul.f32 %v449, %v454
    %458 = vrot.lane.b32.xlu0 %v456, 32
    %v459 = vpop.permute.xlu0 %458
    %v461 = vadd.f32 %v451, %v459
    %v462 = vtanh.pop %v461
    %464 = vrot.lane.b32.xlu0 %v462, 64
    %v465 = vpop.permute.xlu0 %464
    %v467 = vmul.f32 %v449, %v465
    %469 = vrot.lane.b32.xlu0 %v467, 32
    %v470 = vpop.permute.xlu0 %469
    %s472 = scalar_lea.vmem [#allocation8], 24
    %473 = vst.msk [vmem:[%s472] sm:$0xff] %vm147, %v470
    %v474 = vsel %vm147, %v470, 0
    %476 = vmatpush.msra.mxu0 0.0
    %477 = vmatpush.msra.mxu0 0.0
    %478 = vmatpush.msra.mxu0 0.0
    %479 = vmatpush.msra.mxu0 0.0
    %480 = vmatpush.msra.mxu0 0.0
    %481 = vmatpush.msra.mxu0 0.0
    %482 = vmatpush.msra.mxu0 0.0
    %483 = vmatpush.msra.mxu0 0.0
    %484 = vmatpush.msra.mxu0 0.0
    %485 = vmatpush.msra.mxu0 0.0
    %486 = vmatpush.msra.mxu0 0.0
    %487 = vmatpush.msra.mxu0 0.0
    %488 = vmatpush.msra.mxu0 %v72
    %489 = vmatpush.msra.mxu0 %v71
    %490 = vmatpush.msra.mxu0 %v70
    %491 = vmatpush.msra.mxu0 %v69
    %492 = vmatmul.f32.gmra.mxu0 %v474
    %v493 = vpop.f32.mrf.mxu0
    %v494 = vadd.f32 %v79, %v493
    %495 = vdwg.mxu0
    %v496 = vxor.u32 %v494, 2147483648
    %v497 = vmul.f32 %v496, 1.442695
    %v498 = vpow.pop %v497
    %v499 = vadd.f32 %v498, 1.0
    %v500 = vrcp.pop %v499
    %v501 = vmul.f32 %v499, %v500
    %v502 = vsub.f32 1.0, %v501
    %v503 = vmul.f32 %v500, %v502
    %v504 = vadd.f32 %v500, %v503
    %vm505 = vweird.f32 %v499
    %vm506 = vweird.f32 %v500
    %vm507 = vmor %vm505, %vm506
    %v508 = vsel %vm507, %v500, %v504
    %v509 = vand.u32 2147483647, %v499
    %vm510 = vcmp.eq.f32.partialorder %v509, 8.507059e+37
    %v511 = vand.u32 %v499, 2147483648
    %v512 = vor.u32 1.1754944e-38, %v511
    %v513 = vsel %vm510, %v512, %v508
    %v514 = vmul.f32 1.0, %v513
    %v515 = vtanh.pop %v494
    %v516 = vmul.f32 %v514, %v461
    %518 = vrot.lane.b32.xlu0 %v515, 64
    %v519 = vpop.permute.xlu0 %518
    %v521 = vmul.f32 %v514, %v519
    %523 = vrot.lane.b32.xlu0 %v521, 32
    %v524 = vpop.permute.xlu0 %523
    %v526 = vadd.f32 %v516, %v524
    %v527 = vtanh.pop %v526
    %529 = vrot.lane.b32.xlu0 %v527, 64
    %v530 = vpop.permute.xlu0 %529
    %v532 = vmul.f32 %v514, %v530
    %534 = vrot.lane.b32.xlu0 %v532, 32
    %v535 = vpop.permute.xlu0 %534
    %s537 = scalar_lea.vmem [#allocation8], 16
    %538 = vst.msk [vmem:[%s537] sm:$0xff] %vm147, %v535
    %v539 = vsel %vm147, %v535, 0
    %541 = vmatpush.msra.mxu0 0.0
    %542 = vmatpush.msra.mxu0 0.0
    %543 = vmatpush.msra.mxu0 0.0
    %544 = vmatpush.msra.mxu0 0.0
    %545 = vmatpush.msra.mxu0 0.0
    %546 = vmatpush.msra.mxu0 0.0
    %547 = vmatpush.msra.mxu0 0.0
    %548 = vmatpush.msra.mxu0 0.0
    %549 = vmatpush.msra.mxu0 0.0
    %550 = vmatpush.msra.mxu0 0.0
    %551 = vmatpush.msra.mxu0 0.0
    %552 = vmatpush.msra.mxu0 0.0
    %553 = vmatpush.msra.mxu0 %v72
    %554 = vmatpush.msra.mxu0 %v71
    %555 = vmatpush.msra.mxu0 %v70
    %556 = vmatpush.msra.mxu0 %v69
    %557 = vmatmul.f32.gmra.mxu0 %v539
    %v558 = vpop.f32.mrf.mxu0
    %v559 = vadd.f32 %v79, %v558
    %560 = vdwg.mxu0
    %v561 = vxor.u32 %v559, 2147483648
    %v562 = vmul.f32 %v561, 1.442695
    %v563 = vpow.pop %v562
    %v564 = vadd.f32 %v563, 1.0
    %v565 = vrcp.pop %v564
    %v566 = vmul.f32 %v564, %v565
    %v567 = vsub.f32 1.0, %v566
    %v568 = vmul.f32 %v565, %v567
    %v569 = vadd.f32 %v565, %v568
    %vm570 = vweird.f32 %v564
    %vm571 = vweird.f32 %v565
    %vm572 = vmor %vm570, %vm571
    %v573 = vsel %vm572, %v565, %v569
    %v574 = vand.u32 2147483647, %v564
    %vm575 = vcmp.eq.f32.partialorder %v574, 8.507059e+37
    %v576 = vand.u32 %v564, 2147483648
    %v577 = vor.u32 1.1754944e-38, %v576
    %v578 = vsel %vm575, %v577, %v573
    %v579 = vmul.f32 1.0, %v578
    %v580 = vtanh.pop %v559
    %v581 = vmul.f32 %v579, %v526
    %583 = vrot.lane.b32.xlu0 %v580, 64
    %v584 = vpop.permute.xlu0 %583
    %v586 = vmul.f32 %v579, %v584
    %588 = vrot.lane.b32.xlu0 %v586, 32
    %v589 = vpop.permute.xlu0 %588
    %v591 = vadd.f32 %v581, %v589
    %v592 = vtanh.pop %v591
    %594 = vrot.lane.b32.xlu0 %v592, 64
    %v595 = vpop.permute.xlu0 %594
    %v597 = vmul.f32 %v579, %v595
    %599 = vrot.lane.b32.xlu0 %v597, 32
    %v600 = vpop.permute.xlu0 %599
    %s602 = scalar_lea.vmem [#allocation8], 8
    %603 = vst.msk [vmem:[%s602] sm:$0xff] %vm147, %v600
    %604 = vst.msk [vmem:[#allocation9] sm:$0xff] %vm147, %v600
    %606 = vrot.lane.b32.xlu0 %v591, 96
    %v607 = vpop.permute.xlu0 %606
    %609 = vst.msk [vmem:[#allocation11] sm:$0xff] %vm147, %v607
    // Predicated region
    $region34: #{tpu_custom_call.1} parent=1 // pred_check
      _
    $region35: #{tpu_custom_call.1} parent=1 // pred_check_branch
      %611 = sbr.rel (0) target = $region37
    $region36: #{tpu_custom_call.1} parent=1 // pred_region
      %613 = vsyncadd [#allocation4], 0
      %s614 = sshll.u32 [#allocation8], 4
      %s615 = int_to_ptr.vmem [resolvable:$true] %s614
      %s616 = sshll.u32 %s5, 4
      %s617 = int_to_ptr.hbm [resolvable:$true] %s616
      %622 = dma.vmem_to_hbm [thread:$0]  %s615, 1024, %s617, [#allocation4], 128, 128, 8
    $region37: #{tpu_custom_call.1} parent=1 // pred_fallthru
      _
    // Predicated region
    $region38: #{tpu_custom_call.1} parent=1 // pred_check
      _
    $region39: #{tpu_custom_call.1} parent=1 // pred_check_branch
      %624 = sbr.rel (0) target = $region41
    $region40: #{tpu_custom_call.1} parent=1 // pred_region
      %626 = vsyncadd [#allocation10], 0
      %s628 = sshll.u32 [#allocation9], 4
      %s629 = int_to_ptr.vmem [resolvable:$true] %s628
      %s630 = sshll.u32 %s6, 4
      %s631 = int_to_ptr.hbm [resolvable:$true] %s630
      %633 = dma.vmem_to_hbm [thread:$0]  %s629, 128, %s631, [#allocation10]
    $region41: #{tpu_custom_call.1} parent=1 // pred_fallthru
      _
    // Predicated region
    $region42: #{tpu_custom_call.1} parent=1 // pred_check
      _
    $region43: #{tpu_custom_call.1} parent=1 // pred_check_branch
      %635 = sbr.rel (0) target = $region45
    $region44: #{tpu_custom_call.1} parent=1 // pred_region
      %637 = vsyncadd [#allocation10], 0
      %s639 = sshll.u32 [#allocation11], 4
      %s640 = int_to_ptr.vmem [resolvable:$true] %s639
      %s641 = sshll.u32 %s7, 4
      %s642 = int_to_ptr.hbm [resolvable:$true] %s641
      %644 = dma.vmem_to_hbm [thread:$0]  %s640, 128, %s642, [#allocation10]
    $region45: #{tpu_custom_call.1} parent=1 // pred_fallthru
      _
    // Predicated region
    $region46: #{tpu_custom_call.1} parent=1 // pred_check
      _
    $region47: #{tpu_custom_call.1} parent=1 // pred_check_branch
      %646 = sbr.rel (0) target = $region49
    $region48: #{tpu_custom_call.1} parent=1 // pred_region
      %648 = dma.done [#allocation4], 1024
    $region49: #{tpu_custom_call.1} parent=1 // pred_fallthru
      _
    // Predicated region
    $region50: #{tpu_custom_call.1} parent=1 // pred_check
      _
    $region51: #{tpu_custom_call.1} parent=1 // pred_check_branch
      %650 = sbr.rel (0) target = $region53
    $region52: #{tpu_custom_call.1} parent=1 // pred_region
      %652 = dma.done [#allocation10], 128
    $region53: #{tpu_custom_call.1} parent=1 // pred_fallthru
      _
    // Predicated region
    $region54: #{tpu_custom_call.1} parent=1 // pred_check
      _
    $region55: #{tpu_custom_call.1} parent=1 // pred_check_branch
      %654 = sbr.rel (0) target = $region57
    $region56: #{tpu_custom_call.1} parent=1 // pred_region
      %656 = dma.done [#allocation10], 128
    $region57: #{tpu_custom_call.1} parent=1 // pred_fallthru
      _
    %657 = vsyncpa [#allocation3], 1
    %658 = vsyncpa [#allocation6], 1
    %659 = vsyncpa [#allocation4], 1
    %660 = vsyncpa [#allocation10], 1

</llo_original>
